<compile_context>
chip_gen: v7x
topology: tpu7x:2x2x1
jax: 0.10.0
libtpu: 0.0.40
codegen_flags: <defaults>
</compile_context>

<pallas_src>
import functools

import jax
import jax.numpy as jnp
from jax.experimental import pallas as pl
from jax.experimental.pallas import tpu as pltpu

BN_EPS = 1e-5

_STAGE2_VMEM_BUDGET = 26 * 1024 * 1024   # working-set budget for the tile chooser
_STAGE2_VMEM_LIMIT = 32 * 1024 * 1024    # explicit scoped-VMEM limit (covers v5e default)
_MAX_CLASS_TILE = 4096


# ----------------------------------------------------------------------------
# Kernels
# ----------------------------------------------------------------------------
def _stage1_kernel(n_true, x_ref, wconv_ref, bconv_ref, gamma_ref, beta_ref,
                   x1_ref, x2_ref, x2bf_ref):
    """conv1x1-as-matmul + bias, then train-mode BatchNorm folded into one
    scale/shift.  The grid tiles the bottleneck (column) axis, so per-column
    batch statistics are complete within each tile.

    x_ref:     (N_pad, F_pad)  bf16   (resident across grid steps)
    wconv_ref: (F_pad, B_tile) bf16   (streamed)
    bconv/gamma/beta: (1, B_tile) f32
    Outputs: x1 (f32), x2 (f32), x2 in bf16 (feeds the classifier stage).
    """
    # bf16 x bf16 on the MXU, f32 accumulation.
    x1 = jnp.dot(x_ref[...], wconv_ref[...],
                 preferred_element_type=jnp.float32) + bconv_ref[...]
    x1_ref[...] = x1

    n_pad = x1.shape[0]
    inv_n = jnp.float32(1.0 / n_true)
    if n_pad == n_true:
        masked = x1
    else:
        # Padded batch rows must not contaminate the batch statistics.
        row_ids = jax.lax.broadcasted_iota(jnp.int32, (n_pad, 1), 0)
        masked = jnp.where(row_ids < n_true, x1, 0.0)

    # Single pass over the tile: mean and E[x^2].
    mean = jnp.sum(masked, axis=0, keepdims=True) * inv_n
    ex2 = jnp.sum(masked * masked, axis=0, keepdims=True) * inv_n
    var = ex2 - mean * mean

    # Fold BN into a single scale/shift (rsqrt on the EUP slot).
    inv_std = jax.lax.rsqrt(var + BN_EPS)
    scale = gamma_ref[...] * inv_std
    shift = beta_ref[...] - mean * scale
    x2 = x1 * scale + shift
    x2_ref[...] = x2
    x2bf_ref[...] = x2.astype(jnp.bfloat16)


def _classifier_kernel(x2_ref, wcls_ref, label_ref):
    """x_label tile = x2 (N_pad, B_pad) @ w_cls tile (B_pad, class_tile)."""
    label_ref[...] = jnp.dot(x2_ref[...], wcls_ref[...],
                             preferred_element_type=jnp.float32)


# ----------------------------------------------------------------------------
# Helpers
# ----------------------------------------------------------------------------
def _round_up(v, m):
    return ((v + m - 1) // m) * m


def _cdiv(a, b):
    return -(-a // b)


def _pad2d(a, rows, cols, dtype):
    a = jnp.asarray(a, dtype)
    return jnp.pad(a, ((0, rows - a.shape[0]), (0, cols - a.shape[1])))


def _stage2_need_bytes(n_pad, b_pad, tile):
    return (2 * b_pad * tile * 2        # double-buffered bf16 w_cls tile
            + 2 * n_pad * tile * 4      # double-buffered f32 label tile
            + 2 * n_pad * b_pad * 2)    # resident bf16 x2 (counted x2, conservative)


def _choose_class_tile(n_pad, b_pad, c_pad):
    """Largest class tile (multiple of 128, <= _MAX_CLASS_TILE) whose
    double-buffered stage-2 working set fits the VMEM budget; prefer an even
    number of grid steps for v7x 2-TensorCore load balance."""
    tile = 128
    while (tile * 2 <= min(c_pad, _MAX_CLASS_TILE)
           and _stage2_need_bytes(n_pad, b_pad, tile * 2) <= _STAGE2_VMEM_BUDGET):
        tile *= 2
    tile = min(tile, c_pad)
    nt = _cdiv(c_pad, tile)
    if nt > 1 and nt % 2 == 1:
        cand = _round_up(_cdiv(c_pad, nt + 1), 128)
        if cand >= 128 and _cdiv(c_pad, cand) % 2 == 0:
            tile = cand
    return tile


# ----------------------------------------------------------------------------
# One-time parameter packing (keeps padding / bf16 casts OUT of the jitted fwd)
# ----------------------------------------------------------------------------
def pack_params(params):
    """Pad to (8,128)-aligned shapes and cast MXU operands to bf16 once."""
    w_conv = params["w_conv"]    # (feat_dim, B)
    b_conv = params["b_conv"]    # (1, B)
    gamma = params["bn_gamma"]   # (1, B)
    beta = params["bn_beta"]     # (1, B)
    w_cls = params["w_cls"]      # (B, C)

    feat_dim, num_bottleneck = w_conv.shape
    class_num = w_cls.shape[1]
    f_pad = _round_up(feat_dim, 128)
    b_pad = _round_up(num_bottleneck, 128)
    c_pad = _round_up(class_num, 128)   # only to 128; NOT to a full class tile

    packed = {
        "w_conv": _pad2d(w_conv, f_pad, b_pad, jnp.bfloat16),
        "b_conv": _pad2d(jnp.reshape(b_conv, (1, -1)), 1, b_pad, jnp.float32),
        "bn_gamma": _pad2d(jnp.reshape(gamma, (1, -1)), 1, b_pad, jnp.float32),
        "bn_beta": _pad2d(jnp.reshape(beta, (1, -1)), 1, b_pad, jnp.float32),
        "w_cls": _pad2d(w_cls, b_pad, c_pad, jnp.bfloat16),
    }
    dims = {"feat_dim": feat_dim, "num_bottleneck": num_bottleneck,
            "class_num": class_num}
    return packed, dims


# ----------------------------------------------------------------------------
# Forward
# ----------------------------------------------------------------------------
@functools.partial(jax.jit, static_argnames=("feat_dim", "num_bottleneck",
                                              "class_num", "class_tile"))
def class_block_forward(x_nchw, packed, *, feat_dim, num_bottleneck, class_num,
                        class_tile=None):
    """x_nchw: (N, feat_dim, 1, 1) f32. Returns (x_1, x_2, x_label), all f32."""
    N, F, H, W = x_nchw.shape
    assert H == 1 and W == 1, "ClassBlock requires 1x1 spatial input (x.view -> BatchNorm1d)"
    assert F == feat_dim
    x2d = x_nchw.reshape(N, feat_dim)

    f_pad, b_pad = packed["w_conv"].shape
    c_pad = packed["w_cls"].shape[1]

    n_true = max(N, 1)                       # guards 1/N for an empty batch
    n_pad = _round_up(n_true, 16)            # bf16 packs 16 rows per sublane group

    # Only the activation is padded/cast per call (weights were packed offline).
    x_p = _pad2d(x2d, n_pad, f_pad, jnp.bfloat16)

    # ---- Stage 1: conv1x1 + folded train-mode BatchNorm, tiled over B ------
    # TODO(synk): eval-mode BN (running_mean/var buffers + momentum updates) is
    # not implemented; this matches the module's training-mode forward.
    b_tile = min(b_pad, 512)
    n_btiles = _cdiv(b_pad, b_tile)
    stage1_cost = pl.CostEstimate(
        flops=2 * n_true * feat_dim * num_bottleneck,
        transcendentals=num_bottleneck,
        bytes_accessed=(n_pad * f_pad * 2 + f_pad * b_pad * 2
                        + n_pad * b_pad * (4 + 4 + 2)))
    x1_p, x2_p, x2bf_p = pl.pallas_call(
        functools.partial(_stage1_kernel, n_true),
        out_shape=(
            jax.ShapeDtypeStruct((n_pad, b_pad), jnp.float32),   # x_1
            jax.ShapeDtypeStruct((n_pad, b_pad), jnp.float32),   # x_2
            jax.ShapeDtypeStruct((n_pad, b_pad), jnp.bfloat16),  # x_2 (bf16)
        ),
        grid=(n_btiles,),
        in_specs=[
            pl.BlockSpec((n_pad, f_pad), lambda j: (0, 0)),   # x resident
            pl.BlockSpec((f_pad, b_tile), lambda j: (0, j)),  # streamed w_conv
            pl.BlockSpec((1, b_tile), lambda j: (0, j)),
            pl.BlockSpec((1, b_tile), lambda j: (0, j)),
            pl.BlockSpec((1, b_tile), lambda j: (0, j)),
        ],
        out_specs=(
            pl.BlockSpec((n_pad, b_tile), lambda j: (0, j)),
            pl.BlockSpec((n_pad, b_tile), lambda j: (0, j)),
            pl.BlockSpec((n_pad, b_tile), lambda j: (0, j)),
        ),
        compiler_params=pltpu.CompilerParams(
            dimension_semantics=("parallel",)),
        cost_estimate=stage1_cost,
    )(x_p, packed["w_conv"], packed["b_conv"], packed["bn_gamma"],
      packed["bn_beta"])

    # ---- Stage 2: classifier matmul, streamed over the class axis ----------
    if class_tile is None:
        class_tile = _choose_class_tile(n_pad, b_pad, c_pad)
    class_tile = min(class_tile, c_pad)
    assert class_tile % 128 == 0
    num_tiles = _cdiv(c_pad, class_tile)     # partial last tile is fine
    stage2_cost = pl.CostEstimate(
        flops=2 * n_true * num_bottleneck * class_num,
        transcendentals=0,
        bytes_accessed=(b_pad * c_pad * 2 + n_pad * c_pad * 4
                        + n_pad * b_pad * 2))
    label_p = pl.pallas_call(
        _classifier_kernel,
        out_shape=jax.ShapeDtypeStruct((n_pad, c_pad), jnp.float32),
        grid=(num_tiles,),
        in_specs=[
            pl.BlockSpec((n_pad, b_pad), lambda j: (0, 0)),       # x2 resident
            pl.BlockSpec((b_pad, class_tile), lambda j: (0, j)),  # streamed w_cls
        ],
        out_specs=pl.BlockSpec((n_pad, class_tile), lambda j: (0, j)),
        compiler_params=pltpu.CompilerParams(
            dimension_semantics=("parallel",),
            vmem_limit_bytes=_STAGE2_VMEM_LIMIT),
        cost_estimate=stage2_cost,
    )(x2bf_p, packed["w_cls"])

    return (x1_p[:N, :num_bottleneck],
            x2_p[:N, :num_bottleneck],
            label_p[:N, :class_num])


# ----------------------------------------------------------------------------
# Init matching weights_init_kaiming semantics
# ----------------------------------------------------------------------------
def init_params(key, feat_dim, class_num, num_bottleneck):
    k_conv, k_cls = jax.random.split(key)

    # Conv2d(feat_dim, num_bottleneck, 1x1): kaiming_normal_, mode='fan_in'
    #   fan_in = feat_dim, std = sqrt(2 / fan_in); bias = 0
    conv_std = (2.0 / feat_dim) ** 0.5
    w_conv = conv_std * jax.random.normal(k_conv, (feat_dim, num_bottleneck), jnp.float32)
    b_conv = jnp.zeros((1, num_bottleneck), jnp.float32)

    # BatchNorm1d(num_bottleneck): weight = 1, bias = 0 (bias frozen, still 0)
    bn_gamma = jnp.ones((1, num_bottleneck), jnp.float32)
    bn_beta = jnp.zeros((1, num_bottleneck), jnp.float32)

    # Linear(num_bottleneck, class_num, bias=False): kaiming_normal_, mode='fan_out'
    #   fan_out = class_num, std = sqrt(2 / class_num)
    cls_std = (2.0 / class_num) ** 0.5
    w_cls = cls_std * jax.random.normal(k_cls, (num_bottleneck, class_num), jnp.float32)

    return {"w_conv": w_conv, "b_conv": b_conv,
            "bn_gamma": bn_gamma, "bn_beta": bn_beta, "w_cls": w_cls}


if __name__ == "__main__":
    # Small, deliberately misaligned shapes: exercises padding, BN row-masking,
    # the multi-step class grid and the partial-last-tile path.
    N, feat_dim, num_bottleneck, class_num = 14, 40, 72, 300

    key = jax.random.PRNGKey(0)
    k_x, k_p = jax.random.split(key)
    x = jax.random.normal(k_x, (N, feat_dim, 1, 1), jnp.float32)
    params = init_params(k_p, feat_dim, class_num, num_bottleneck)
    packed, dims = pack_params(params)   # one-time pad + bf16 cast (outside jit)

    # Explicit class_tile=128 -> 3-step grid over the class axis.
    x_1, x_2, x_label = class_block_forward(x, packed, class_tile=128, **dims)
    jax.block_until_ready((x_1, x_2, x_label))

    # Auto tile: C=300 -> c_pad=384, tile=256 -> 2 steps with a partial last tile.
    x_1b, x_2b, x_labelb = class_block_forward(x, packed, **dims)
    jax.block_until_ready((x_1b, x_2b, x_labelb))

    # Pure-JAX reference using the same bf16-cast matmul inputs (f32 math /
    # accumulation) so the check isolates kernel semantics from the intended
    # bf16 MXU precision choice. BN is training-mode, biased variance.
    x2d = x.reshape(N, feat_dim)
    xb = x2d.astype(jnp.bfloat16).astype(jnp.float32)
    wcb = params["w_conv"].astype(jnp.bfloat16).astype(jnp.float32)
    ref_x1 = xb @ wcb + params["b_conv"]
    mu = ref_x1.mean(axis=0, keepdims=True)
    var = ((ref_x1 - mu) ** 2).mean(axis=0, keepdims=True)
    ref_x2 = (ref_x1 - mu) / jnp.sqrt(var + BN_EPS) * params["bn_gamma"] + params["bn_beta"]
    ref_label = (ref_x2.astype(jnp.bfloat16).astype(jnp.float32)
                 @ params["w_cls"].astype(jnp.bfloat16).astype(jnp.float32))

    for (a1, a2, al) in ((x_1, x_2, x_label), (x_1b, x_2b, x_labelb)):
        assert a1.shape == (N, num_bottleneck)
        assert a2.shape == (N, num_bottleneck)
        assert al.shape == (N, class_num)
        assert jnp.allclose(a1, ref_x1, atol=2e-3, rtol=2e-3)
        assert jnp.allclose(a2, ref_x2, atol=2e-3, rtol=2e-3)
        assert jnp.allclose(al, ref_label, atol=5e-3, rtol=5e-3)

    print("KERNEL_OK")
</pallas_src>

<mosaic_0001>
module attributes {stable_mosaic.version = 11 : i64} {
  func.func @_classifier_kernel(%arg0: i32, %arg1: memref<16x128xbf16, #tpu.memory_space<vmem>>, %arg2: memref<128x128xbf16, #tpu.memory_space<vmem>>, %arg3: memref<16x128xf32, #tpu.memory_space<vmem>>) attributes {dimension_semantics = [#tpu.dimension_semantics<parallel>], iteration_bounds = array<i64: 3>, scalar_prefetch = 0 : i64, scratch_operands = 0 : i64, tpu.core_type = #tpu.core_type<tc>, window_params = [{pipeline_mode = #tpu.pipeline_mode<synchronous>, transform_indices = @transform_0, window_bounds = array<i64: 16, 128>}, {transform_indices = @transform_1, window_bounds = array<i64: 128, 128>}, {transform_indices = @transform_2, window_bounds = array<i64: 16, 128>}]} {
    %c0 = arith.constant 0 : index
    %c0_0 = arith.constant 0 : index
    %0 = vector.load %arg1[%c0, %c0_0] : memref<16x128xbf16, #tpu.memory_space<vmem>>, vector<16x128xbf16>
    %c0_1 = arith.constant 0 : index
    %c0_2 = arith.constant 0 : index
    %1 = vector.load %arg2[%c0_1, %c0_2] : memref<128x128xbf16, #tpu.memory_space<vmem>>, vector<128x128xbf16>
    %cst = arith.constant dense<0.000000e+00> : vector<16x128xf32>
    %2 = tpu.matmul %0, %1, %cst {dimension_numbers = #tpu.dot_dimension_numbers<[1], [0], [0], [1], [0, 0, 1, 1], [], []>} : vector<16x128xbf16>, vector<128x128xbf16>, vector<16x128xf32> -> vector<16x128xf32>
    %c0_3 = arith.constant 0 : index
    %c0_4 = arith.constant 0 : index
    %3 = vector.load %arg3[%c0_3, %c0_4] : memref<16x128xf32, #tpu.memory_space<vmem>>, vector<16x128xf32>
    tpu.vector_store %arg3[%c0_3, %c0_4], %2 {strides = array<i32>} : memref<16x128xf32, #tpu.memory_space<vmem>>, vector<16x128xf32>,
    return
  }
  func.func @transform_0(%arg0: i32) -> (i32, i32) {
    %c0_i32 = arith.constant 0 : i32
    %c0_i32_0 = arith.constant 0 : i32
    %c0_i32_1 = arith.constant 0 : i32
    return %c0_i32, %c0_i32_0 : i32, i32
  }
  func.func @transform_1(%arg0: i32) -> (i32, i32) {
    %c0_i32 = arith.constant 0 : i32
    %c0_i32_0 = arith.constant 0 : i32
    return %c0_i32, %arg0 : i32, i32
  }
  func.func @transform_2(%arg0: i32) -> (i32, i32) {
    %c0_i32 = arith.constant 0 : i32
    %c0_i32_0 = arith.constant 0 : i32
    return %c0_i32, %arg0 : i32, i32
  }
}

module attributes {stable_mosaic.version = 11 : i64} {
  func.func @_stage1_kernel(%arg0: i32, %arg1: memref<16x128xbf16, #tpu.memory_space<vmem>>, %arg2: memref<128x128xbf16, #tpu.memory_space<vmem>>, %arg3: memref<1x128xf32, #tpu.memory_space<vmem>>, %arg4: memref<1x128xf32, #tpu.memory_space<vmem>>, %arg5: memref<1x128xf32, #tpu.memory_space<vmem>>, %arg6: memref<16x128xf32, #tpu.memory_space<vmem>>, %arg7: memref<16x128xf32, #tpu.memory_space<vmem>>, %arg8: memref<16x128xbf16, #tpu.memory_space<vmem>>) attributes {dimension_semantics = [#tpu.dimension_semantics<parallel>], iteration_bounds = array<i64: 1>, scalar_prefetch = 0 : i64, scratch_operands = 0 : i64, tpu.core_type = #tpu.core_type<tc>, window_params = [{pipeline_mode = #tpu.pipeline_mode<synchronous>, transform_indices = @transform_0, window_bounds = array<i64: 16, 128>}, {transform_indices = @transform_1, window_bounds = array<i64: 128, 128>}, {transform_indices = @transform_2, window_bounds = array<i64: 1, 128>}, {transform_indices = @transform_3, window_bounds = array<i64: 1, 128>}, {transform_indices = @transform_4, window_bounds = array<i64: 1, 128>}, {transform_indices = @transform_5, window_bounds = array<i64: 16, 128>}, {transform_indices = @transform_6, window_bounds = array<i64: 16, 128>}, {transform_indices = @transform_7, window_bounds = array<i64: 16, 128>}]} {
    %c0 = arith.constant 0 : index
    %c0_0 = arith.constant 0 : index
    %0 = vector.load %arg1[%c0, %c0_0] : memref<16x128xbf16, #tpu.memory_space<vmem>>, vector<16x128xbf16>
    %c0_1 = arith.constant 0 : index
    %c0_2 = arith.constant 0 : index
    %1 = vector.load %arg2[%c0_1, %c0_2] : memref<128x128xbf16, #tpu.memory_space<vmem>>, vector<128x128xbf16>
    %cst = arith.constant dense<0.000000e+00> : vector<16x128xf32>
    %2 = tpu.matmul %0, %1, %cst {dimension_numbers = #tpu.dot_dimension_numbers<[1], [0], [0], [1], [0, 0, 1, 1], [], []>} : vector<16x128xbf16>, vector<128x128xbf16>, vector<16x128xf32> -> vector<16x128xf32>
    %c0_3 = arith.constant 0 : index
    %c0_4 = arith.constant 0 : index
    %3 = vector.load %arg3[%c0_3, %c0_4] : memref<1x128xf32, #tpu.memory_space<vmem>>, vector<1x128xf32>
    %4 = vector.broadcast %3 : vector<1x128xf32> to vector<16x128xf32>
    %5 = arith.addf %2, %4 : vector<16x128xf32>
    %c0_5 = arith.constant 0 : index
    %c0_6 = arith.constant 0 : index
    %6 = vector.load %arg6[%c0_5, %c0_6] : memref<16x128xf32, #tpu.memory_space<vmem>>, vector<16x128xf32>
    tpu.vector_store %arg6[%c0_5, %c0_6], %5 {strides = array<i32>} : memref<16x128xf32, #tpu.memory_space<vmem>>, vector<16x128xf32>,
    %7 = tpu.iota {dimensions = array<i32: 0>} : vector<16x1xi32>
    %c14_i32 = arith.constant 14 : i32
    %8 = vector.broadcast %c14_i32 : i32 to vector<16x1xi32>
    %9 = arith.cmpi slt, %7, %8 : vector<16x1xi32>
    %cst_7 = arith.constant 0.000000e+00 : f32
    %10 = vector.shape_cast %9 : vector<16x1xi1> to vector<16x1xi1>
    %11 = vector.broadcast %10 : vector<16x1xi1> to vector<16x128xi1>
    %12 = vector.broadcast %cst_7 : f32 to vector<16x128xf32>
    %13 = arith.select %11, %5, %12 : vector<16x128xi1>, vector<16x128xf32>
    %cst_8 = arith.constant dense<0.000000e+00> : vector<128xf32>
    %14 = vector.multi_reduction <add>, %13, %cst_8 [0] : vector<16x128xf32> to vector<128xf32>
    %15 = vector.shape_cast %14 : vector<128xf32> to vector<1x128xf32>
    %cst_9 = arith.constant 0.0714285746 : f32
    %16 = vector.broadcast %cst_9 : f32 to vector<1x128xf32>
    %17 = arith.mulf %15, %16 : vector<1x128xf32>
    %18 = arith.mulf %13, %13 : vector<16x128xf32>
    %cst_10 = arith.constant dense<0.000000e+00> : vector<128xf32>
    %19 = vector.multi_reduction <add>, %18, %cst_10 [0] : vector<16x128xf32> to vector<128xf32>
    %20 = vector.shape_cast %19 : vector<128xf32> to vector<1x128xf32>
    %cst_11 = arith.constant 0.0714285746 : f32
    %21 = vector.broadcast %cst_11 : f32 to vector<1x128xf32>
    %22 = arith.mulf %20, %21 : vector<1x128xf32>
    %23 = arith.mulf %17, %17 : vector<1x128xf32>
    %24 = arith.subf %22, %23 : vector<1x128xf32>
    %cst_12 = arith.constant 9.99999974E-6 : f32
    %25 = vector.broadcast %cst_12 : f32 to vector<1x128xf32>
    %26 = arith.addf %24, %25 : vector<1x128xf32>
    %27 = math.rsqrt %26 : vector<1x128xf32>
    %c0_13 = arith.constant 0 : index
    %c0_14 = arith.constant 0 : index
    %28 = vector.load %arg4[%c0_13, %c0_14] : memref<1x128xf32, #tpu.memory_space<vmem>>, vector<1x128xf32>
    %29 = arith.mulf %28, %27 : vector<1x128xf32>
    %c0_15 = arith.constant 0 : index
    %c0_16 = arith.constant 0 : index
    %30 = vector.load %arg5[%c0_15, %c0_16] : memref<1x128xf32, #tpu.memory_space<vmem>>, vector<1x128xf32>
    %31 = arith.mulf %17, %29 : vector<1x128xf32>
    %32 = arith.subf %30, %31 : vector<1x128xf32>
    %33 = vector.broadcast %29 : vector<1x128xf32> to vector<16x128xf32>
    %34 = arith.mulf %5, %33 : vector<16x128xf32>
    %35 = vector.broadcast %32 : vector<1x128xf32> to vector<16x128xf32>
    %36 = arith.addf %34, %35 : vector<16x128xf32>
    %c0_17 = arith.constant 0 : index
    %c0_18 = arith.constant 0 : index
    %37 = vector.load %arg7[%c0_17, %c0_18] : memref<16x128xf32, #tpu.memory_space<vmem>>, vector<16x128xf32>
    tpu.vector_store %arg7[%c0_17, %c0_18], %36 {strides = array<i32>} : memref<16x128xf32, #tpu.memory_space<vmem>>, vector<16x128xf32>,
    %38 = arith.truncf %36 : vector<16x128xf32> to vector<16x128xbf16>
    %c0_19 = arith.constant 0 : index
    %c0_20 = arith.constant 0 : index
    %39 = vector.load %arg8[%c0_19, %c0_20] : memref<16x128xbf16, #tpu.memory_space<vmem>>, vector<16x128xbf16>
    tpu.vector_store %arg8[%c0_19, %c0_20], %38 {strides = array<i32>} : memref<16x128xbf16, #tpu.memory_space<vmem>>, vector<16x128xbf16>,
    return
  }
  func.func @transform_0(%arg0: i32) -> (i32, i32) {
    %c0_i32 = arith.constant 0 : i32
    %c0_i32_0 = arith.constant 0 : i32
    %c0_i32_1 = arith.constant 0 : i32
    return %c0_i32, %c0_i32_0 : i32, i32
  }
  func.func @transform_1(%arg0: i32) -> (i32, i32) {
    %c0_i32 = arith.constant 0 : i32
    %c0_i32_0 = arith.constant 0 : i32
    return %c0_i32, %arg0 : i32, i32
  }
  func.func @transform_2(%arg0: i32) -> (i32, i32) {
    %c0_i32 = arith.constant 0 : i32
    %c0_i32_0 = arith.constant 0 : i32
    return %c0_i32, %arg0 : i32, i32
  }
  func.func @transform_3(%arg0: i32) -> (i32, i32) {
    %c0_i32 = arith.constant 0 : i32
    %c0_i32_0 = arith.constant 0 : i32
    return %c0_i32, %arg0 : i32, i32
  }
  func.func @transform_4(%arg0: i32) -> (i32, i32) {
    %c0_i32 = arith.constant 0 : i32
    %c0_i32_0 = arith.constant 0 : i32
    return %c0_i32, %arg0 : i32, i32
  }
  func.func @transform_5(%arg0: i32) -> (i32, i32) {
    %c0_i32 = arith.constant 0 : i32
    %c0_i32_0 = arith.constant 0 : i32
    return %c0_i32, %arg0 : i32, i32
  }
  func.func @transform_6(%arg0: i32) -> (i32, i32) {
    %c0_i32 = arith.constant 0 : i32
    %c0_i32_0 = arith.constant 0 : i32
    return %c0_i32, %arg0 : i32, i32
  }
  func.func @transform_7(%arg0: i32) -> (i32, i32) {
    %c0_i32 = arith.constant 0 : i32
    %c0_i32_0 = arith.constant 0 : i32
    return %c0_i32, %arg0 : i32, i32
  }
}

</mosaic_0001>

<llo_original>
// kernel: class_block_forward.3
$region0: #{class_block_forward.3}
  #allocation0 [shape = 'u32[]', space=smem, size = 0x4, offset = 0x4, fixed_abs, tag = 'smem constant byte address 0x4 - core index']
  #allocation1 [shape = 'u32[144,128]{1,0:T(1,128)}', space=vmem, size = 0x12000, scoped, tag = 'internal scratch']
  %s0 = inlined_call_operand.vmem [shape: bf16[16,128], index: 0, kind: input, shape index: {}]
  %s1 = inlined_call_operand.hbm [shape: bf16[128,384], index: 1, kind: input, shape index: {}]
  %s2 = inlined_call_operand.hbm [shape: f32[16,384], index: 2, kind: output, shape index: {}]
  %s3 = sld [smem:[#allocation0]]
  $region45: #{class_block_forward.3} parent=0
    _
  %s5 = ssub.s32 1, %s3
  %s6 = scalar_select 0, %s5, %s3
  $region1: #{class_block_forward.3} parent=0
    #allocation2 [shape = 'u8[65536]{0}', space=vmem, size = 0x10000, scoped, tag = 'input window, operand 1']
    #allocation3 [shape = 's32[2]{0}', space=sflag, size = 0x8, scoped, tag = 'scoped memory for class_block_forward.3']
    #allocation4 [shape = 's32[2]{0}', space=sflag, size = 0x8, scoped, tag = 'scoped memory for class_block_forward.3']
    #allocation5 [shape = 'u8[16384]{0}', space=vmem, size = 0x4000, scoped, tag = 'output window, operand 0']
    %7 = vsyncpa [#allocation3], 0
    %s8 = scalar_lea.sflag [#allocation3], 1
    %9 = vsyncpa %s8, 0
    %10 = vsyncpa [#allocation4], 0
    %s11 = scalar_lea.sflag [#allocation4], 1
    %12 = vsyncpa %s11, 0
    loop: start=0, step=1, limit=5
    $region2: #{class_block_forward.3} parent=1 // loop_pre_header
      _
    $region3: #{class_block_forward.3} parent=1 // loop_header
      %s14 = sphi 0, %s18
      %p15 = scmp.ge.s32.totalorder %s14, 5
      %s22 = sphi 0, %s22
      %s24 = sphi 0, %s22
      %s25 = sphi 0, %s24
      %s39 = sphi 0, %s25
      %s45 = sphi 0, %s47
      %s48 = sphi 0, %s45
      %s49 = sphi 0, %s48
      %s65 = sphi 0, %s49
      %s71 = sphi 0, %s73
      %s74 = sphi 0, %s71
      %s75 = sphi 0, %s74
      %s91 = sphi 0, %s75
    $region4: #{class_block_forward.3} parent=1 // loop_header_branch
      %17 = sbr.rel (%p15) target = $region8
    $region5: #{class_block_forward.3} parent=1 // loop_body
      %s19 = ssub.s32 %s14, 1
      %s20 = ssub.s32 %s14, 2
      %s21 = sadd.s32 %s14, 1
      %s23 = sadd.s32 %s22, 1
      %p26 = scmp.eq.s32.totalorder %s14, 2
      %p27 = scmp.ne.s32.totalorder %s22, %s24
      %p28 = scmp.eq.s32.totalorder %s14, 0
      %p29 = por %p27, %p28
      %p30 = scmp.ne.s32.totalorder %s22, %s24
      %p31 = scmp.eq.s32.totalorder %s19, 2
      %p32 = por %p30, %p31
      %p33 = scmp.ne.s32.totalorder %s24, %s25
      %p34 = scmp.eq.s32.totalorder %s19, 0
      %p35 = por %p33, %p34
      %p36 = scmp.ne.s32.totalorder %s24, %s25
      %p37 = scmp.eq.s32.totalorder %s20, 2
      %p38 = por %p36, %p37
      %p40 = scmp.ne.s32.totalorder %s25, %s39
      %p41 = scmp.eq.s32.totalorder %s20, 0
      %p42 = por %p40, %p41
      %s43 = ssub.s32 %s14, %s21
      %p44 = scmp.eq.s32.totalorder %s43, 0
      %s46 = sadd.s32 %s45, 1
      %s47 = scalar_select %p44, %s45, %s46
      %p50 = pneg %p44
      %p51 = scmp.eq.s32.totalorder %s14, 2
      %p52 = por %p50, %p51
      %p53 = scmp.ne.s32.totalorder %s45, %s48
      %p54 = scmp.eq.s32.totalorder %s14, 0
      %p55 = por %p53, %p54
      %p56 = scmp.ne.s32.totalorder %s45, %s48
      %p57 = scmp.eq.s32.totalorder %s19, 2
      %p58 = por %p56, %p57
      %p59 = scmp.ne.s32.totalorder %s48, %s49
      %p60 = scmp.eq.s32.totalorder %s19, 0
      %p61 = por %p59, %p60
      %p62 = scmp.ne.s32.totalorder %s48, %s49
      %p63 = scmp.eq.s32.totalorder %s20, 2
      %p64 = por %p62, %p63
      %p66 = scmp.ne.s32.totalorder %s49, %s65
      %p67 = scmp.eq.s32.totalorder %s20, 0
      %p68 = por %p66, %p67
      %s69 = ssub.s32 %s14, %s21
      %p70 = scmp.eq.s32.totalorder %s69, 0
      %s72 = sadd.s32 %s71, 1
      %s73 = scalar_select %p70, %s71, %s72
      %p76 = pneg %p70
      %p77 = scmp.eq.s32.totalorder %s14, 2
      %p78 = por %p76, %p77
      %p79 = scmp.ne.s32.totalorder %s71, %s74
      %p80 = scmp.eq.s32.totalorder %s14, 0
      %p81 = por %p79, %p80
      %p82 = scmp.ne.s32.totalorder %s71, %s74
      %p83 = scmp.eq.s32.totalorder %s19, 2
      %p84 = por %p82, %p83
      %p85 = scmp.ne.s32.totalorder %s74, %s75
      %p86 = scmp.eq.s32.totalorder %s19, 0
      %p87 = por %p85, %p86
      %p88 = scmp.ne.s32.totalorder %s74, %s75
      %p89 = scmp.eq.s32.totalorder %s20, 2
      %p90 = por %p88, %p89
      %p92 = scmp.ne.s32.totalorder %s75, %s91
      %p93 = scmp.eq.s32.totalorder %s20, 0
      %p94 = por %p92, %p93
      %p95 = scmp.le.s32.totalorder 1, %s14
      %p96 = scmp.lt.s32.totalorder %s14, 4
      %p97 = pnand %p95, %p96
      %p98 = pneg %p97
      // Predicated region
      $region9: #{class_block_forward.3} parent=5 // pred_check
        _
      $region10: #{class_block_forward.3} parent=5 // pred_check_branch
        %100 = sbr.rel (%p97) target = $region12
      $region11: #{class_block_forward.3} parent=5 // pred_region
        %s101 = ssub.s32 %s14, 1
        // Predicated region
        $region13: #{class_block_forward.3} parent=11 // pred_check
          %p102 = pneg %p35
        $region14: #{class_block_forward.3} parent=11 // pred_check_branch
          %104 = sbr.rel (%p102) target = $region16
        $region15: #{class_block_forward.3} parent=11 // pred_region
          _
        $region16: #{class_block_forward.3} parent=11 // pred_fallthru
          _
      $region12: #{class_block_forward.3} parent=5 // pred_fallthru
        _
      %p105 = scmp.lt.s32.totalorder %s14, 3
      // Predicated region
      $region17: #{class_block_forward.3} parent=5 // pred_check
        %p106 = pneg %p105
      $region18: #{class_block_forward.3} parent=5 // pred_check_branch
        %108 = sbr.rel (%p106) target = $region20
      $region19: #{class_block_forward.3} parent=5 // pred_region
        // Predicated region
        $region21: #{class_block_forward.3} parent=19 // pred_check
          %p109 = pneg %p55
        $region22: #{class_block_forward.3} parent=19 // pred_check_branch
          %111 = sbr.rel (%p109) target = $region24
        $region23: #{class_block_forward.3} parent=19 // pred_region
          %s112 = sand.u32 %s45, 1
          %s113 = scalar_lea.sflag [#allocation3], %s112
          %s114 = sand.u32 %s45, 1
          %s115 = smul.addr %s114, 64
          %s116 = scalar_lea.vmem [#allocation2], %s115
          %s118 = ssub.s32 1024, 1024
          %119 = vsyncadd %s113, %s118
          %s120 = smul.addr %s14, 64
          %s121 = scalar_lea.hbm %s1, %s120
          %s122 = sshll.u32 %s116, 4
          %s123 = int_to_ptr.vmem [resolvable:$true] %s122
          %128 = dma.hbm_to_vmem [thread:$0]  %s121, 1024, %s123, %s113, 192, 64, 4
        $region24: #{class_block_forward.3} parent=19 // pred_fallthru
          _
      $region20: #{class_block_forward.3} parent=5 // pred_fallthru
        _
      %p129 = scmp.le.s32.totalorder 1, %s14
      %p130 = scmp.lt.s32.totalorder %s14, 4
      %p131 = pnand %p129, %p130
      %p132 = pneg %p131
      // Predicated region
      $region25: #{class_block_forward.3} parent=5 // pred_check
        _
      $region26: #{class_block_forward.3} parent=5 // pred_check_branch
        %134 = sbr.rel (%p131) target = $region28
      $region27: #{class_block_forward.3} parent=5 // pred_region
        %s135 = ssub.s32 %s14, 1
        %s136 = sand.u32 %s48, 1
        %s137 = scalar_lea.sflag [#allocation3], %s136
        %s138 = sand.u32 %s48, 1
        %s139 = smul.addr %s138, 64
        %s140 = scalar_lea.vmem [#allocation2], %s139
        // Predicated region
        $region29: #{class_block_forward.3} parent=27 // pred_check
          %p141 = pneg %p61
        $region30: #{class_block_forward.3} parent=27 // pred_check_branch
          %143 = sbr.rel (%p141) target = $region32
        $region31: #{class_block_forward.3} parent=27 // pred_region
          %144 = dma.done %s137, 1024
        $region32: #{class_block_forward.3} parent=27 // pred_fallthru
          _
        %p145 = pneg %p35
        %p146 = pneg %p32
        %s147 = sand.u32 %s48, 1
        %s148 = scalar_lea.sflag [#allocation3], %s147
        %s149 = sand.u32 %s48, 1
        %s150 = smul.addr %s149, 64
        %s151 = scalar_lea.vmem [#allocation2], %s150
        %p152 = pneg %p61
        %p153 = pneg %p58
        %p154 = pneg %p87
        %p155 = pneg %p84
        %s156 = sand.u32 %s74, 1
        %s157 = scalar_lea.sflag [#allocation4], %s156
        %s158 = sand.u32 %s74, 1
        %s159 = smul.addr %s158, 16
        %s160 = scalar_lea.vmem [#allocation5], %s159
        %v162 = vld [vmem:[%s0] sm:$0xf]
        %v163 = vld [vmem:[%s0 + $0x4] sm:$0xf]
        %v164 = vld [vmem:[%s140] sm:$0xf]
        %v165 = vld [vmem:[%s140 + $0x4] sm:$0xf]
        %v166 = vld [vmem:[%s140 + $0x8] sm:$0xf]
        %v167 = vld [vmem:[%s140 + $0xc] sm:$0xf]
        %v168 = vld [vmem:[%s140 + $0x10] sm:$0xf]
        %v169 = vld [vmem:[%s140 + $0x14] sm:$0xf]
        %v170 = vld [vmem:[%s140 + $0x18] sm:$0xf]
        %v171 = vld [vmem:[%s140 + $0x1c] sm:$0xf]
        %v172 = vld [vmem:[%s140 + $0x20] sm:$0xf]
        %v173 = vld [vmem:[%s140 + $0x24] sm:$0xf]
        %v174 = vld [vmem:[%s140 + $0x28] sm:$0xf]
        %v175 = vld [vmem:[%s140 + $0x2c] sm:$0xf]
        %v176 = vld [vmem:[%s140 + $0x30] sm:$0xf]
        %v177 = vld [vmem:[%s140 + $0x34] sm:$0xf]
        %v178 = vld [vmem:[%s140 + $0x38] sm:$0xf]
        %v179 = vld [vmem:[%s140 + $0x3c] sm:$0xf]
        %v182 = vunpack.c.l.b16 %v162
        %v183 = vunpack.c.l.b16 %v163
        %v184 = vpack.c.b16 %v183, %v182
        %v202 = vunpack.c.l.b16 %v164
        %v203 = vunpack.c.l.b16 %v165
        %v204 = vunpack.c.l.b16 %v166
        %v205 = vunpack.c.l.b16 %v167
        %v206 = vunpack.c.l.b16 %v168
        %v207 = vunpack.c.l.b16 %v169
        %v208 = vunpack.c.l.b16 %v170
        %v209 = vunpack.c.l.b16 %v171
        %v210 = vunpack.c.l.b16 %v172
        %v211 = vunpack.c.l.b16 %v173
        %v212 = vunpack.c.l.b16 %v174
        %v213 = vunpack.c.l.b16 %v175
        %v214 = vunpack.c.l.b16 %v176
        %v215 = vunpack.c.l.b16 %v177
        %v216 = vunpack.c.l.b16 %v178
        %v217 = vunpack.c.l.b16 %v179
        %v218 = vpack.c.b16 %v203, %v202
        %v219 = vpack.c.b16 %v205, %v204
        %v220 = vpack.c.b16 %v207, %v206
        %v221 = vpack.c.b16 %v209, %v208
        %v222 = vpack.c.b16 %v211, %v210
        %v223 = vpack.c.b16 %v213, %v212
        %v224 = vpack.c.b16 %v215, %v214
        %v225 = vpack.c.b16 %v217, %v216
        %234 = vmatprep.subr.bf16.mxu0 0
        %235 = vmatpush1.bf16.msra.mxu0 %v218
        %236 = vmatprep.subr.bf16.mxu0 0
        %237 = vmatpush1.bf16.msra.mxu0 %v219
        %238 = vmatprep.subr.bf16.mxu0 0
        %239 = vmatpush1.bf16.msra.mxu0 %v220
        %240 = vmatprep.subr.bf16.mxu0 0
        %241 = vmatpush1.bf16.msra.mxu0 %v221
        %242 = vmatprep.subr.bf16.mxu0 0
        %243 = vmatpush1.bf16.msra.mxu0 %v222
        %244 = vmatprep.subr.bf16.mxu0 0
        %245 = vmatpush1.bf16.msra.mxu0 %v223
        %246 = vmatprep.subr.bf16.mxu0 0
        %247 = vmatpush1.bf16.msra.mxu0 %v224
        %248 = vmatprep.subr.bf16.mxu0 0
        %249 = vmatpush1.bf16.msra.mxu0 %v225
        %250 = vmatprep.subr.bf16.mxu0 0
        %251 = vmatpush1.bf16.msra.mxu0 0
        %252 = vmatprep.subr.bf16.mxu0 0
        %253 = vmatpush1.bf16.msra.mxu0 0
        %254 = vmatprep.subr.bf16.mxu0 0
        %255 = vmatpush1.bf16.msra.mxu0 0
        %256 = vmatprep.subr.bf16.mxu0 0
        %257 = vmatpush1.bf16.msra.mxu0 0
        %258 = vmatprep.subr.bf16.mxu0 0
        %259 = vmatpush1.bf16.msra.mxu0 0
        %260 = vmatprep.subr.bf16.mxu0 0
        %261 = vmatpush1.bf16.msra.mxu0 0
        %262 = vmatprep.subr.bf16.mxu0 0
        %263 = vmatpush1.bf16.msra.mxu0 0
        %264 = vmatprep.subr.bf16.mxu0 0
        %265 = vmatpush1.bf16.msra.mxu0 0
        %266 = vmatprep.mubr.bf16.mxu0 0
        %267 = vmatmul.mubr.bf16.gmra.mrb[0].mxu0 %v184
        %v268 = vpop.f32.mrb[0].mxu0
        %v269 = vadd.f32 0.0, %v268
        %v270 = vpop.f32.mrb[0].mxu0
        %v271 = vpop.f32.mrb[0].mxu0
        %v272 = vadd.f32 0.0, %v271
        %v273 = vpop.f32.mrb[0].mxu0
        %274 = vdwg.mxu0
        %275 = vst [vmem:[%s160] sm:$0xff] %v269
        %276 = vst [vmem:[%s160 + $0x8] sm:$0xff] %v272
        %s277 = sand.u32 %s74, 1
        %s278 = scalar_lea.sflag [#allocation4], %s277
        %s279 = sand.u32 %s74, 1
        %s280 = smul.addr %s279, 16
        %s281 = scalar_lea.vmem [#allocation5], %s280
        // Predicated region
        $region33: #{class_block_forward.3} parent=27 // pred_check
          %p282 = pneg %p84
        $region34: #{class_block_forward.3} parent=27 // pred_check_branch
          %284 = sbr.rel (%p282) target = $region36
        $region35: #{class_block_forward.3} parent=27 // pred_region
          %s286 = ssub.s32 256, 256
          %287 = vsyncadd %s278, %s286
          %s288 = smul.addr %s19, 128
          %s289 = scalar_lea.hbm %s2, %s288
          %s290 = sshll.u32 %s281, 4
          %s291 = int_to_ptr.vmem [resolvable:$true] %s290
          %296 = dma.vmem_to_hbm [thread:$0]  %s291, 256, %s289, %s278, 128, 384, 8
        $region36: #{class_block_forward.3} parent=27 // pred_fallthru
          _
      $region28: #{class_block_forward.3} parent=5 // pred_fallthru
        _
      %p297 = scmp.le.s32.totalorder 2, %s14
      // Predicated region
      $region37: #{class_block_forward.3} parent=5 // pred_check
        %p298 = pneg %p297
      $region38: #{class_block_forward.3} parent=5 // pred_check_branch
        %300 = sbr.rel (%p298) target = $region40
      $region39: #{class_block_forward.3} parent=5 // pred_region
        %s301 = ssub.s32 %s14, 2
        // Predicated region
        $region41: #{class_block_forward.3} parent=39 // pred_check
          %p302 = pneg %p90
        $region42: #{class_block_forward.3} parent=39 // pred_check_branch
          %304 = sbr.rel (%p302) target = $region44
        $region43: #{class_block_forward.3} parent=39 // pred_region
          %s305 = sand.u32 %s75, 1
          %s306 = scalar_lea.sflag [#allocation4], %s305
          %s307 = sand.u32 %s75, 1
          %s308 = smul.addr %s307, 16
          %s309 = scalar_lea.vmem [#allocation5], %s308
          %310 = dma.done %s306, 256
        $region44: #{class_block_forward.3} parent=39 // pred_fallthru
          _
      $region40: #{class_block_forward.3} parent=5 // pred_fallthru
        _
    $region6: #{class_block_forward.3} parent=1 // loop_footer
      %s18 = sadd.s32 1, %s14
    $region7: #{class_block_forward.3} parent=1 // loop_footer_branch
      %13 = sbr.rel target = $region3
    $region8: #{class_block_forward.3} parent=1 // loop_exit
      _
    %311 = vsyncpa [#allocation3], 1
    %s312 = scalar_lea.sflag [#allocation3], 1
    %313 = vsyncpa %s312, 1
    %314 = vsyncpa [#allocation4], 1
    %s315 = scalar_lea.sflag [#allocation4], 1
    %316 = vsyncpa %s315, 1

// kernel: class_block_forward.2
$region0: #{class_block_forward.2}
  #allocation0 [shape = 'u32[]', space=smem, size = 0x4, offset = 0x4, fixed_abs, tag = 'smem constant byte address 0x4 - core index']
  #allocation1 [shape = 'u32[144,128]{1,0:T(1,128)}', space=vmem, size = 0x12000, scoped, tag = 'internal scratch']
  %s0 = inlined_call_operand.vmem [shape: bf16[16,128], index: 0, kind: input, shape index: {}]
  %s1 = inlined_call_operand.hbm [shape: bf16[128,128], index: 1, kind: input, shape index: {}]
  %s2 = inlined_call_operand.vmem [shape: f32[1,128], index: 2, kind: input, shape index: {}]
  %s3 = inlined_call_operand.vmem [shape: f32[1,128], index: 3, kind: input, shape index: {}]
  %s4 = inlined_call_operand.vmem [shape: f32[1,128], index: 4, kind: input, shape index: {}]
  %s5 = inlined_call_operand.hbm [shape: f32[16,128], index: 5, kind: output, shape index: {0}]
  %s6 = inlined_call_operand.hbm [shape: f32[16,128], index: 6, kind: output, shape index: {1}]
  %s7 = inlined_call_operand.vmem [shape: bf16[16,128], index: 7, kind: output, shape index: {2}]
  %8 = xla_tuple %s5, %s6, %s7
  %s9 = sld [smem:[#allocation0]]
  $region50: #{class_block_forward.2} parent=0
    _
  %s11 = ssub.s32 1, %s9
  %s12 = scalar_select 0, %s11, %s9
  $region1: #{class_block_forward.2} parent=0
    #allocation2 [shape = 'u8[32768]{0}', space=vmem, size = 0x8000, scoped, tag = 'input window, operand 1, single buffered']
    #allocation3 [shape = 's32[1]{0}', space=sflag, size = 0x4, scoped, tag = 'scoped memory for class_block_forward.2']
    #allocation4 [shape = 's32[1]{0}', space=sflag, size = 0x4, scoped, tag = 'scoped memory for class_block_forward.2']
    #allocation5 [shape = 'u8[8192]{0}', space=vmem, size = 0x2000, scoped, tag = 'output window, operand 0, single buffered']
    #allocation6 [shape = 'u8[8192]{0}', space=vmem, size = 0x2000, scoped, tag = 'output window, operand 1, single buffered']
    #allocation7 [shape = 's32[1]{0}', space=sflag, size = 0x4, scoped, tag = 'scoped memory for class_block_forward.2']
    %13 = vsyncpa [#allocation3], 0
    %14 = vsyncpa [#allocation4], 0
    %15 = vsyncpa [#allocation7], 0
    // Predicated region
    $region2: #{class_block_forward.2} parent=1 // pred_check
      _
    $region3: #{class_block_forward.2} parent=1 // pred_check_branch
      %17 = sbr.rel (0) target = $region5
    $region4: #{class_block_forward.2} parent=1 // pred_region
      _
    $region5: #{class_block_forward.2} parent=1 // pred_fallthru
      _
    // Predicated region
    $region6: #{class_block_forward.2} parent=1 // pred_check
      _
    $region7: #{class_block_forward.2} parent=1 // pred_check_branch
      %19 = sbr.rel (0) target = $region9
    $region8: #{class_block_forward.2} parent=1 // pred_region
      %s21 = ssub.s32 1024, 1024
      %22 = vsyncadd [#allocation3], %s21
      %s23 = sshll.u32 [#allocation2], 4
      %s24 = int_to_ptr.vmem [resolvable:$true] %s23
      %29 = dma.hbm_to_vmem [thread:$0]  %s1, 1024, %s24, [#allocation3], 64, 64, 4
    $region9: #{class_block_forward.2} parent=1 // pred_fallthru
      _
    // Predicated region
    $region10: #{class_block_forward.2} parent=1 // pred_check
      _
    $region11: #{class_block_forward.2} parent=1 // pred_check_branch
      %31 = sbr.rel (0) target = $region13
    $region12: #{class_block_forward.2} parent=1 // pred_region
      _
    $region13: #{class_block_forward.2} parent=1 // pred_fallthru
      _
    // Predicated region
    $region14: #{class_block_forward.2} parent=1 // pred_check
      _
    $region15: #{class_block_forward.2} parent=1 // pred_check_branch
      %33 = sbr.rel (0) target = $region17
    $region16: #{class_block_forward.2} parent=1 // pred_region
      _
    $region17: #{class_block_forward.2} parent=1 // pred_fallthru
      _
    // Predicated region
    $region18: #{class_block_forward.2} parent=1 // pred_check
      _
    $region19: #{class_block_forward.2} parent=1 // pred_check_branch
      %35 = sbr.rel (0) target = $region21
    $region20: #{class_block_forward.2} parent=1 // pred_region
      _
    $region21: #{class_block_forward.2} parent=1 // pred_fallthru
      _
    // Predicated region
    $region22: #{class_block_forward.2} parent=1 // pred_check
      _
    $region23: #{class_block_forward.2} parent=1 // pred_check_branch
      %37 = sbr.rel (0) target = $region25
    $region24: #{class_block_forward.2} parent=1 // pred_region
      %38 = dma.done [#allocation3], 1024
    $region25: #{class_block_forward.2} parent=1 // pred_fallthru
      _
    %v40 = vld [vmem:[%s0] sm:$0xf]
    %v41 = vld [vmem:[%s0 + $0x4] sm:$0xf]
    %v42 = vld [vmem:[#allocation2] sm:$0xf]
    %v43 = vld [vmem:[#allocation2 + $0x4] sm:$0xf]
    %v44 = vld [vmem:[#allocation2 + $0x8] sm:$0xf]
    %v45 = vld [vmem:[#allocation2 + $0xc] sm:$0xf]
    %v46 = vld [vmem:[#allocation2 + $0x10] sm:$0xf]
    %v47 = vld [vmem:[#allocation2 + $0x14] sm:$0xf]
    %v48 = vld [vmem:[#allocation2 + $0x18] sm:$0xf]
    %v49 = vld [vmem:[#allocation2 + $0x1c] sm:$0xf]
    %v50 = vld [vmem:[#allocation2 + $0x20] sm:$0xf]
    %v51 = vld [vmem:[#allocation2 + $0x24] sm:$0xf]
    %v52 = vld [vmem:[#allocation2 + $0x28] sm:$0xf]
    %v53 = vld [vmem:[#allocation2 + $0x2c] sm:$0xf]
    %v54 = vld [vmem:[#allocation2 + $0x30] sm:$0xf]
    %v55 = vld [vmem:[#allocation2 + $0x34] sm:$0xf]
    %v56 = vld [vmem:[#allocation2 + $0x38] sm:$0xf]
    %v57 = vld [vmem:[#allocation2 + $0x3c] sm:$0xf]
    %v58 = vld [vmem:[%s2] sm:$0x1]
    %v60 = vlaneseq
    %v61 = vshrl.u32 %v60, 7
    %v62 = vsub.s32 0, %v61
    %v63 = vrot.slane %v58, %v62
    %v67 = vunpack.c.l.b16 %v40
    %v68 = vunpack.c.l.b16 %v41
    %v69 = vpack.c.b16 %v68, %v67
    %v87 = vunpack.c.l.b16 %v42
    %v88 = vunpack.c.l.b16 %v43
    %v89 = vunpack.c.l.b16 %v44
    %v90 = vunpack.c.l.b16 %v45
    %v91 = vunpack.c.l.b16 %v46
    %v92 = vunpack.c.l.b16 %v47
    %v93 = vunpack.c.l.b16 %v48
    %v94 = vunpack.c.l.b16 %v49
    %v95 = vunpack.c.l.b16 %v50
    %v96 = vunpack.c.l.b16 %v51
    %v97 = vunpack.c.l.b16 %v52
    %v98 = vunpack.c.l.b16 %v53
    %v99 = vunpack.c.l.b16 %v54
    %v100 = vunpack.c.l.b16 %v55
    %v101 = vunpack.c.l.b16 %v56
    %v102 = vunpack.c.l.b16 %v57
    %v103 = vpack.c.b16 %v88, %v87
    %v104 = vpack.c.b16 %v90, %v89
    %v105 = vpack.c.b16 %v92, %v91
    %v106 = vpack.c.b16 %v94, %v93
    %v107 = vpack.c.b16 %v96, %v95
    %v108 = vpack.c.b16 %v98, %v97
    %v109 = vpack.c.b16 %v100, %v99
    %v110 = vpack.c.b16 %v102, %v101
    %119 = vmatprep.subr.bf16.mxu0 0
    %120 = vmatpush1.bf16.msra.mxu0 %v103
    %121 = vmatprep.subr.bf16.mxu0 0
    %122 = vmatpush1.bf16.msra.mxu0 %v104
    %123 = vmatprep.subr.bf16.mxu0 0
    %124 = vmatpush1.bf16.msra.mxu0 %v105
    %125 = vmatprep.subr.bf16.mxu0 0
    %126 = vmatpush1.bf16.msra.mxu0 %v106
    %127 = vmatprep.subr.bf16.mxu0 0
    %128 = vmatpush1.bf16.msra.mxu0 %v107
    %129 = vmatprep.subr.bf16.mxu0 0
    %130 = vmatpush1.bf16.msra.mxu0 %v108
    %131 = vmatprep.subr.bf16.mxu0 0
    %132 = vmatpush1.bf16.msra.mxu0 %v109
    %133 = vmatprep.subr.bf16.mxu0 0
    %134 = vmatpush1.bf16.msra.mxu0 %v110
    %135 = vmatprep.subr.bf16.mxu0 0
    %136 = vmatpush1.bf16.msra.mxu0 0
    %137 = vmatprep.subr.bf16.mxu0 0
    %138 = vmatpush1.bf16.msra.mxu0 0
    %139 = vmatprep.subr.bf16.mxu0 0
    %140 = vmatpush1.bf16.msra.mxu0 0
    %141 = vmatprep.subr.bf16.mxu0 0
    %142 = vmatpush1.bf16.msra.mxu0 0
    %143 = vmatprep.subr.bf16.mxu0 0
    %144 = vmatpush1.bf16.msra.mxu0 0
    %145 = vmatprep.subr.bf16.mxu0 0
    %146 = vmatpush1.bf16.msra.mxu0 0
    %147 = vmatprep.subr.bf16.mxu0 0
    %148 = vmatpush1.bf16.msra.mxu0 0
    %149 = vmatprep.subr.bf16.mxu0 0
    %150 = vmatpush1.bf16.msra.mxu0 0
    %151 = vmatprep.mubr.bf16.mxu0 0
    %152 = vmatmul.mubr.bf16.gmra.mrb[0].mxu0 %v69
    %v153 = vpop.f32.mrb[0].mxu0
    %v154 = vadd.f32 %v63, %v153
    %v155 = vpop.f32.mrb[0].mxu0
    %v156 = vpop.f32.mrb[0].mxu0
    %v157 = vadd.f32 %v63, %v156
    %v158 = vpop.f32.mrb[0].mxu0
    %159 = vdwg.mxu0
    %160 = vst [vmem:[#allocation5] sm:$0xff] %v154
    %161 = vst [vmem:[#allocation5 + $0x8] sm:$0xff] %v157
    %v162 = vlaneseq
    %v163 = vshrl.u32 %v162, 7
    %v164 = vadd.s32 %v163, 8
    %vm165 = vcmp.lt.s32.totalorder %v163, 14
    %vm166 = vcmp.lt.s32.totalorder %v164, 14
    %v167 = vsel %vm165, 1, 0
    %v168 = vsel %vm166, 1, 0
    %vm169 = vcmp.eq.s32.totalorder %v167, 1
    %vm170 = vcmp.eq.s32.totalorder %v168, 1
    %v171 = vsel %vm169, %v154, 0.0
    %v172 = vsel %vm170, %v157, 0.0
    %v173 = vadd.f32 %v171, %v172
    %v174 = vrot.slane %v173, 4
    %v175 = vadd.f32 %v173, %v174
    %v176 = vrot.slane %v175, 2
    %v177 = vadd.f32 %v175, %v176
    %v178 = vrot.slane %v177, 1
    %v179 = vadd.f32 %v177, %v178
    %v180 = vmul.f32 %v179, 0.071428575
    %v181 = vmul.f32 %v171, %v171
    %v182 = vmul.f32 %v172, %v172
    %v183 = vadd.f32 %v181, %v182
    %v184 = vrot.slane %v183, 4
    %v185 = vadd.f32 %v183, %v184
    %v186 = vrot.slane %v185, 2
    %v187 = vadd.f32 %v185, %v186
    %v188 = vrot.slane %v187, 1
    %v189 = vadd.f32 %v187, %v188
    %v190 = vmul.f32 %v189, 0.071428575
    %v191 = vmul.f32 %v180, %v180
    %v192 = vsub.f32 %v190, %v191
    %v193 = vadd.f32 %v192, 1e-05
    %v194 = vrsqrt.pop %v193
    %v195 = vld [vmem:[%s3] sm:$0x1]
    %v196 = vmul.f32 %v195, %v194
    %v197 = vld [vmem:[%s4] sm:$0x1]
    %v198 = vmul.f32 %v180, %v196
    %v199 = vsub.f32 %v197, %v198
    %v201 = vlaneseq
    %v202 = vshrl.u32 %v201, 7
    %v203 = vsub.s32 0, %v202
    %v204 = vrot.slane %v196, %v203
    %v206 = vmul.f32 %v154, %v204
    %v207 = vmul.f32 %v157, %v204
    %v209 = vlaneseq
    %v210 = vshrl.u32 %v209, 7
    %v211 = vsub.s32 0, %v210
    %v212 = vrot.slane %v199, %v211
    %v214 = vadd.f32 %v206, %v212
    %v215 = vadd.f32 %v207, %v212
    %216 = vst [vmem:[#allocation6] sm:$0xff] %v214
    %217 = vst [vmem:[#allocation6 + $0x8] sm:$0xff] %v215
    %v218 = vpack.c.bf16 %v215, %v214
    %v220 = vunpack.c.l.b16 %v218
    %v221 = vunpack.c.h.b16 %v218
    %v222 = vpack.c.b16 %v220, %v220
    %v223 = vpack.c.b16 %v221, %v221
    %226 = vst [vmem:[%s7] sm:$0xf] %v222
    %227 = vst [vmem:[%s7 + $0x4] sm:$0xf] %v223
    // Predicated region
    $region26: #{class_block_forward.2} parent=1 // pred_check
      _
    $region27: #{class_block_forward.2} parent=1 // pred_check_branch
      %229 = sbr.rel (0) target = $region29
    $region28: #{class_block_forward.2} parent=1 // pred_region
      %s231 = ssub.s32 256, 256
      %232 = vsyncadd [#allocation4], %s231
      %s233 = sshll.u32 [#allocation5], 4
      %s234 = int_to_ptr.vmem [resolvable:$true] %s233
      %239 = dma.vmem_to_hbm [thread:$0]  %s234, 256, %s5, [#allocation4], 128, 128, 8
    $region29: #{class_block_forward.2} parent=1 // pred_fallthru
      _
    // Predicated region
    $region30: #{class_block_forward.2} parent=1 // pred_check
      _
    $region31: #{class_block_forward.2} parent=1 // pred_check_branch
      %241 = sbr.rel (0) target = $region33
    $region32: #{class_block_forward.2} parent=1 // pred_region
      %s243 = ssub.s32 256, 256
      %244 = vsyncadd [#allocation7], %s243
      %s245 = sshll.u32 [#allocation6], 4
      %s246 = int_to_ptr.vmem [resolvable:$true] %s245
      %251 = dma.vmem_to_hbm [thread:$0]  %s246, 256, %s6, [#allocation7], 128, 128, 8
    $region33: #{class_block_forward.2} parent=1 // pred_fallthru
      _
    // Predicated region
    $region34: #{class_block_forward.2} parent=1 // pred_check
      _
    $region35: #{class_block_forward.2} parent=1 // pred_check_branch
      %253 = sbr.rel (0) target = $region37
    $region36: #{class_block_forward.2} parent=1 // pred_region
      _
    $region37: #{class_block_forward.2} parent=1 // pred_fallthru
      _
    // Predicated region
    $region38: #{class_block_forward.2} parent=1 // pred_check
      _
    $region39: #{class_block_forward.2} parent=1 // pred_check_branch
      %255 = sbr.rel (0) target = $region41
    $region40: #{class_block_forward.2} parent=1 // pred_region
      %256 = dma.done [#allocation4], 256
    $region41: #{class_block_forward.2} parent=1 // pred_fallthru
      _
    // Predicated region
    $region42: #{class_block_forward.2} parent=1 // pred_check
      _
    $region43: #{class_block_forward.2} parent=1 // pred_check_branch
      %258 = sbr.rel (0) target = $region45
    $region44: #{class_block_forward.2} parent=1 // pred_region
      %259 = dma.done [#allocation7], 256
    $region45: #{class_block_forward.2} parent=1 // pred_fallthru
      _
    // Predicated region
    $region46: #{class_block_forward.2} parent=1 // pred_check
      _
    $region47: #{class_block_forward.2} parent=1 // pred_check_branch
      %261 = sbr.rel (0) target = $region49
    $region48: #{class_block_forward.2} parent=1 // pred_region
      _
    $region49: #{class_block_forward.2} parent=1 // pred_fallthru
      _
    %262 = vsyncpa [#allocation3], 1
    %263 = vsyncpa [#allocation4], 1
    %264 = vsyncpa [#allocation7], 1

</llo_original>
